<compile_context>
chip_gen: v5e
topology: v5e:2x2
jax: 0.10.0
libtpu: 0.0.40
codegen_flags: <defaults>
</compile_context>

<pallas_src>
import jax
import jax.numpy as jnp
from jax.experimental import pallas as pl
from jax.experimental.pallas import tpu as pltpu


def yolo_head_kernel(pred_ref, gs_ref, anchors_ref, out_ref):
    """Decode TB fused (batch, anchor) slices.

    pred_ref    : (TB, bbox_attrs, HW)  raw network output (native dtype)
    gs_ref      : (4, HW)               [gx*sw, gy*sh, sw, sh] resident tile
    anchors_ref : (TB, 2, 1)            per-slice anchor (w, h)
    out_ref     : (TB, bbox_attrs, HW)  decoded [bx, by, bw, bh, conf, cls...]
    """
    p = pred_ref[...].astype(jnp.float32)          # (TB, attrs, HW)
    gs = gs_ref[...]                               # (4, HW)
    anc = anchors_ref[...]                         # (TB, 2, 1)

    # EUP work only where it is needed: sigmoid on rows 0:2 and 4:, exp on 2:4.
    sig_xy = jax.nn.sigmoid(p[:, 0:2, :])          # (TB, 2, HW)
    ex_wh = jnp.exp(p[:, 2:4, :])                  # (TB, 2, HW)
    sig_rest = jax.nn.sigmoid(p[:, 4:, :])         # (TB, attrs-4, HW)

    # Row-sliced affine fix-ups; class/conf rows pass straight through.
    # rows 0:1 -> sigmoid * stride + grid*stride  (== (sigmoid + grid)*stride)
    out_ref[:, 0:2, :] = sig_xy * gs[2:4, :][None] + gs[0:2, :][None]
    out_ref[:, 2:4, :] = ex_wh * anc               # exp * anchor_wh
    out_ref[:, 4:, :] = sig_rest


def _choose_tb(n_slices, per_slice_bytes, target_block_bytes):
    """Largest divisor of n_slices with block <= target and grid >= 2 steps."""
    if n_slices <= 1:
        return 1
    best = 1
    for tb in range(1, n_slices // 2 + 1):
        if n_slices % tb:
            continue
        if tb * per_slice_bytes > target_block_bytes:
            break
        best = tb
    return best


def yolo_head_forward(x, anchors, num_classes, image_size=(416, 416),
                      target_block_bytes=2 << 20):
    """Pallas implementation of YOLOHead.forward(input, targets=None)."""
    bs, c, in_h, in_w = x.shape
    num_anchors = len(anchors)
    bbox_attrs = 5 + num_classes
    assert c == num_anchors * bbox_attrs
    stride_h = image_size[1] / in_h
    stride_w = image_size[0] / in_w
    hw = in_h * in_w
    n_slices = bs * num_anchors

    # Pure view, no cast / copy: input DMA'd in its native dtype.
    pred = x.reshape(n_slices, bbox_attrs, hw)

    # Resident aux tile: rows 0/1 are pre-scaled grid coords, rows 2/3 the
    # per-row stride scale (avoids capturing an array constant in the kernel).
    gx = jnp.tile(jnp.arange(in_w, dtype=jnp.float32), in_h) * jnp.float32(stride_w)
    gy = jnp.repeat(jnp.arange(in_h, dtype=jnp.float32), in_w) * jnp.float32(stride_h)
    sw_row = jnp.full((hw,), stride_w, dtype=jnp.float32)
    sh_row = jnp.full((hw,), stride_h, dtype=jnp.float32)
    gs = jnp.stack([gx, gy, sw_row, sh_row], axis=0)          # (4, HW)

    # Per-(b, a) anchor (w, h) vector: row i -> anchor (i % num_anchors).
    anchors_arr = jnp.asarray(anchors, dtype=jnp.float32)     # (A, 2)
    anchors_full = jnp.tile(anchors_arr, (bs, 1)).reshape(n_slices, 2, 1)

    # Fuse several (b, a) slices per grid step (amortize per-step overhead),
    # but keep >= 2 grid steps so megacore sharding has work to split.
    in_itemsize = jnp.dtype(x.dtype).itemsize
    per_slice_bytes = bbox_attrs * hw * (in_itemsize + 4)     # in + out
    tb = _choose_tb(n_slices, per_slice_bytes, target_block_bytes)
    grid = (n_slices // tb,)

    # Explicit VMEM budget: double-buffered in/out blocks plus small aux,
    # capped so it is safe on v7x (64 MiB physical) as well as v5e/v6e.
    block_bytes = tb * bbox_attrs * hw * (in_itemsize + 4)
    aux_bytes = 4 * hw * 4 + tb * 2 * 4
    vmem_limit = int(min(max(2 * (block_bytes + aux_bytes) + (2 << 20),
                             16 << 20), 32 << 20))

    out = pl.pallas_call(
        yolo_head_kernel,
        out_shape=jax.ShapeDtypeStruct((n_slices, bbox_attrs, hw), jnp.float32),
        grid_spec=pltpu.PrefetchScalarGridSpec(
            num_scalar_prefetch=0,
            grid=grid,
            in_specs=[
                pl.BlockSpec((tb, bbox_attrs, hw), lambda i: (i, 0, 0)),
                pl.BlockSpec((4, hw), lambda i: (0, 0)),       # resident aux
                pl.BlockSpec((tb, 2, 1), lambda i: (i, 0, 0)),
            ],
            out_specs=pl.BlockSpec((tb, bbox_attrs, hw), lambda i: (i, 0, 0)),
        ),
        compiler_params=pltpu.CompilerParams(
            dimension_semantics=("parallel",),
            vmem_limit_bytes=vmem_limit),
    )(pred, gs, anchors_full)

    # Rearrange to the torch output layout: (bs, num_anchors*H*W, bbox_attrs).
    # Kept in the wrapper (memory-bound extra pass); downstream consumers that
    # can take the (bbox_attrs, HW) layout should skip this and fuse instead.
    out = out.reshape(bs, num_anchors, bbox_attrs, hw)
    out = jnp.transpose(out, (0, 1, 3, 2)).reshape(bs, num_anchors * hw,
                                                   bbox_attrs)
    return out


def yolo_head_ref(x, anchors, num_classes, image_size=(416, 416)):
    """Pure-JAX reference mirroring the PyTorch forward (targets=None)."""
    bs, c, in_h, in_w = x.shape
    num_anchors = len(anchors)
    bbox_attrs = 5 + num_classes
    stride_h = image_size[1] / in_h
    stride_w = image_size[0] / in_w

    pred = x.astype(jnp.float32).reshape(bs, num_anchors, bbox_attrs, in_h,
                                         in_w).transpose(0, 1, 3, 4, 2)
    sx = jax.nn.sigmoid(pred[..., 0])
    sy = jax.nn.sigmoid(pred[..., 1])
    w = pred[..., 2]
    h = pred[..., 3]
    conf = jax.nn.sigmoid(pred[..., 4])
    cls = jax.nn.sigmoid(pred[..., 5:])

    gx = jnp.broadcast_to(jnp.arange(in_w, dtype=jnp.float32)[None, :],
                          (in_h, in_w))
    gy = jnp.broadcast_to(jnp.arange(in_h, dtype=jnp.float32)[:, None],
                          (in_h, in_w))
    a = jnp.asarray(anchors, jnp.float32)
    aw = a[:, 0][None, :, None, None]
    ah = a[:, 1][None, :, None, None]

    bx = (sx + gx) * stride_w
    by = (sy + gy) * stride_h
    bw = jnp.exp(w) * aw
    bh = jnp.exp(h) * ah
    boxes = jnp.stack([bx, by, bw, bh], axis=-1)
    return jnp.concatenate([boxes.reshape(bs, -1, 4),
                            conf.reshape(bs, -1, 1),
                            cls.reshape(bs, -1, num_classes)], axis=-1)


if __name__ == "__main__":
    # Small deterministic config: 3 anchors (this pyramid level), 4 classes.
    anchors = [(10.0, 13.0), (16.0, 30.0), (33.0, 23.0)]
    num_classes = 4
    bbox_attrs = 5 + num_classes
    bs, in_h, in_w = 2, 16, 16
    channels = len(anchors) * bbox_attrs        # 27

    key = jax.random.PRNGKey(0)
    x = jax.random.normal(key, (bs, channels, in_h, in_w), dtype=jnp.float32)

    out = yolo_head_forward(x, anchors, num_classes, image_size=(416, 416))
    out = jax.block_until_ready(out)

    ref = yolo_head_ref(x, anchors, num_classes, image_size=(416, 416))
    assert out.shape == (bs, len(anchors) * in_h * in_w, bbox_attrs), out.shape
    assert jnp.allclose(out, ref, atol=1e-4, rtol=1e-4), \
        float(jnp.max(jnp.abs(out - ref)))

    print("KERNEL_OK")
</pallas_src>

<mosaic_0001>
module attributes {stable_mosaic.version = 11 : i64} {
  func.func @yolo_head_kernel(%arg0: i32, %arg1: memref<3x9x256xf32, #tpu.memory_space<vmem>>, %arg2: memref<4x256xf32, #tpu.memory_space<vmem>>, %arg3: memref<3x2x1xf32, #tpu.memory_space<vmem>>, %arg4: memref<3x9x256xf32, #tpu.memory_space<vmem>>) attributes {dimension_semantics = [#tpu.dimension_semantics<parallel>], iteration_bounds = array<i64: 2>, scalar_prefetch = 0 : i64, scratch_operands = 0 : i64, tpu.core_type = #tpu.core_type<tc>, window_params = [{transform_indices = @transform_0, window_bounds = array<i64: 3, 9, 256>}, {pipeline_mode = #tpu.pipeline_mode<synchronous>, transform_indices = @transform_1, window_bounds = array<i64: 4, 256>}, {transform_indices = @transform_2, window_bounds = array<i64: 3, 2, 1>}, {transform_indices = @transform_3, window_bounds = array<i64: 3, 9, 256>}]} {
    %c0 = arith.constant 0 : index
    %c0_0 = arith.constant 0 : index
    %c0_1 = arith.constant 0 : index
    %0 = vector.load %arg1[%c0, %c0_0, %c0_1] : memref<3x9x256xf32, #tpu.memory_space<vmem>>, vector<3x9x256xf32>
    %c0_2 = arith.constant 0 : index
    %c0_3 = arith.constant 0 : index
    %1 = vector.load %arg2[%c0_2, %c0_3] : memref<4x256xf32, #tpu.memory_space<vmem>>, vector<4x256xf32>
    %c0_4 = arith.constant 0 : index
    %c0_5 = arith.constant 0 : index
    %c0_6 = arith.constant 0 : index
    %2 = vector.load %arg3[%c0_4, %c0_5, %c0_6] : memref<3x2x1xf32, #tpu.memory_space<vmem>>, vector<3x2x1xf32>
    %3 = vector.extract_strided_slice %0 {offsets = [0, 0, 0], sizes = [3, 2, 256], strides = [1, 1, 1]} : vector<3x9x256xf32> to vector<3x2x256xf32>
    %4 = arith.negf %3 : vector<3x2x256xf32>
    %5 = math.exp %4 : vector<3x2x256xf32>
    %cst = arith.constant 1.000000e+00 : f32
    %6 = vector.broadcast %cst : f32 to vector<3x2x256xf32>
    %7 = arith.addf %6, %5 : vector<3x2x256xf32>
    %8 = arith.divf %6, %7 : vector<3x2x256xf32>
    %9 = vector.extract_strided_slice %0 {offsets = [0, 2, 0], sizes = [3, 2, 256], strides = [1, 1, 1]} : vector<3x9x256xf32> to vector<3x2x256xf32>
    %10 = math.exp %9 : vector<3x2x256xf32>
    %11 = vector.extract_strided_slice %0 {offsets = [0, 4, 0], sizes = [3, 5, 256], strides = [1, 1, 1]} : vector<3x9x256xf32> to vector<3x5x256xf32>
    %12 = arith.negf %11 : vector<3x5x256xf32>
    %13 = math.exp %12 : vector<3x5x256xf32>
    %cst_7 = arith.constant 1.000000e+00 : f32
    %14 = vector.broadcast %cst_7 : f32 to vector<3x5x256xf32>
    %15 = arith.addf %14, %13 : vector<3x5x256xf32>
    %16 = arith.divf %14, %15 : vector<3x5x256xf32>
    %17 = vector.extract_strided_slice %1 {offsets = [2, 0], sizes = [2, 256], strides = [1, 1]} : vector<4x256xf32> to vector<2x256xf32>
    %18 = vector.shape_cast %17 : vector<2x256xf32> to vector<1x2x256xf32>
    %19 = vector.broadcast %18 : vector<1x2x256xf32> to vector<3x2x256xf32>
    %20 = arith.mulf %8, %19 : vector<3x2x256xf32>
    %21 = vector.extract_strided_slice %1 {offsets = [0, 0], sizes = [2, 256], strides = [1, 1]} : vector<4x256xf32> to vector<2x256xf32>
    %22 = vector.shape_cast %21 : vector<2x256xf32> to vector<1x2x256xf32>
    %23 = vector.broadcast %22 : vector<1x2x256xf32> to vector<3x2x256xf32>
    %24 = arith.addf %20, %23 : vector<3x2x256xf32>
    %c0_8 = arith.constant 0 : index
    %c0_9 = arith.constant 0 : index
    %c0_10 = arith.constant 0 : index
    %25 = vector.load %arg4[%c0_8, %c0_9, %c0_10] : memref<3x9x256xf32, #tpu.memory_space<vmem>>, vector<3x2x256xf32>
    tpu.vector_store %arg4[%c0_8, %c0_9, %c0_10], %24 {strides = array<i32>} : memref<3x9x256xf32, #tpu.memory_space<vmem>>, vector<3x2x256xf32>,
    %26 = vector.broadcast %2 : vector<3x2x1xf32> to vector<3x2x256xf32>
    %27 = arith.mulf %10, %26 : vector<3x2x256xf32>
    %c0_11 = arith.constant 0 : index
    %c2 = arith.constant 2 : index
    %c0_12 = arith.constant 0 : index
    %28 = vector.load %arg4[%c0_11, %c2, %c0_12] : memref<3x9x256xf32, #tpu.memory_space<vmem>>, vector<3x2x256xf32>
    tpu.vector_store %arg4[%c0_11, %c2, %c0_12], %27 {strides = array<i32>} : memref<3x9x256xf32, #tpu.memory_space<vmem>>, vector<3x2x256xf32>,
    %c0_13 = arith.constant 0 : index
    %c4 = arith.constant 4 : index
    %c0_14 = arith.constant 0 : index
    %29 = vector.load %arg4[%c0_13, %c4, %c0_14] : memref<3x9x256xf32, #tpu.memory_space<vmem>>, vector<3x5x256xf32>
    tpu.vector_store %arg4[%c0_13, %c4, %c0_14], %16 {strides = array<i32>} : memref<3x9x256xf32, #tpu.memory_space<vmem>>, vector<3x5x256xf32>,
    return
  }
  func.func @transform_0(%arg0: i32) -> (i32, i32, i32) {
    %c0_i32 = arith.constant 0 : i32
    %c0_i32_0 = arith.constant 0 : i32
    %c0_i32_1 = arith.constant 0 : i32
    return %arg0, %c0_i32, %c0_i32_0 : i32, i32, i32
  }
  func.func @transform_1(%arg0: i32) -> (i32, i32) {
    %c0_i32 = arith.constant 0 : i32
    %c0_i32_0 = arith.constant 0 : i32
    %c0_i32_1 = arith.constant 0 : i32
    return %c0_i32, %c0_i32_0 : i32, i32
  }
  func.func @transform_2(%arg0: i32) -> (i32, i32, i32) {
    %c0_i32 = arith.constant 0 : i32
    %c0_i32_0 = arith.constant 0 : i32
    %c0_i32_1 = arith.constant 0 : i32
    return %arg0, %c0_i32, %c0_i32_0 : i32, i32, i32
  }
  func.func @transform_3(%arg0: i32) -> (i32, i32, i32) {
    %c0_i32 = arith.constant 0 : i32
    %c0_i32_0 = arith.constant 0 : i32
    %c0_i32_1 = arith.constant 0 : i32
    return %arg0, %c0_i32, %c0_i32_0 : i32, i32, i32
  }
}

</mosaic_0001>

<llo_original>
// kernel: tpu_custom_call.1
$region0: #{tpu_custom_call.1}
  #allocation0 [shape = 'u32[]', space=smem, size = 0x4, offset = 0x4, fixed_abs, tag = 'smem constant byte address 0x4 - core index']
  #allocation1 [shape = 'u32[72,128]{1,0:T(1,128)}', space=vmem, size = 0x9000, scoped, tag = 'internal scratch']
  %s0 = inlined_call_operand.vmem [shape: f32[6,9,256], index: 0, kind: input, shape index: {}]
  %s1 = inlined_call_operand.vmem [shape: f32[4,256], index: 1, kind: input, shape index: {}]
  %s2 = inlined_call_operand.vmem [shape: f32[6,2,1], index: 2, kind: input, shape index: {}]
  %s3 = inlined_call_operand.vmem [shape: f32[6,9,256], index: 3, kind: output, shape index: {}]
  %s4 = sld [smem:[#allocation0]]
  $region45: #{tpu_custom_call.1} parent=0
    _
  %s6 = ssub.s32 1, %s4
  %s7 = scalar_select 0, %s6, %s4
  loop: start=0, step=1, limit=4
  $region2: #{tpu_custom_call.1} parent=0 // loop_pre_header
    _
  $region3: #{tpu_custom_call.1} parent=0 // loop_header
    %s9 = sphi 0, %s13
    %p10 = scmp.ge.s32.totalorder %s9, 4
    %s19 = sphi 0, %s21
    %s22 = sphi 0, %s19
    %s23 = sphi 0, %s22
    %s39 = sphi 0, %s23
    %s43 = sphi 0, %s43
    %s45 = sphi 0, %s43
    %s46 = sphi 0, %s45
    %s60 = sphi 0, %s46
    %s66 = sphi 0, %s68
    %s69 = sphi 0, %s66
    %s70 = sphi 0, %s69
    %s86 = sphi 0, %s70
    %s92 = sphi 0, %s94
    %s95 = sphi 0, %s92
    %s96 = sphi 0, %s95
    %s112 = sphi 0, %s96
  $region4: #{tpu_custom_call.1} parent=0 // loop_header_branch
    %12 = sbr.rel (%p10) target = $region8
  $region5: #{tpu_custom_call.1} parent=0 // loop_body
    %s14 = ssub.s32 %s9, 1
    %s15 = ssub.s32 %s9, 2
    %s16 = sadd.s32 %s9, 1
    %s17 = ssub.s32 %s9, %s16
    %p18 = scmp.eq.s32.totalorder %s17, 0
    %s20 = sadd.s32 %s19, 1
    %s21 = scalar_select %p18, %s19, %s20
    %p24 = pneg %p18
    %p25 = scmp.eq.s32.totalorder %s9, 1
    %p26 = por %p24, %p25
    %p27 = scmp.ne.s32.totalorder %s19, %s22
    %p28 = scmp.eq.s32.totalorder %s9, 0
    %p29 = por %p27, %p28
    %p30 = scmp.ne.s32.totalorder %s19, %s22
    %p31 = scmp.eq.s32.totalorder %s14, 1
    %p32 = por %p30, %p31
    %p33 = scmp.ne.s32.totalorder %s22, %s23
    %p34 = scmp.eq.s32.totalorder %s14, 0
    %p35 = por %p33, %p34
    %p36 = scmp.ne.s32.totalorder %s22, %s23
    %p37 = scmp.eq.s32.totalorder %s15, 1
    %p38 = por %p36, %p37
    %p40 = scmp.ne.s32.totalorder %s23, %s39
    %p41 = scmp.eq.s32.totalorder %s15, 0
    %p42 = por %p40, %p41
    %s44 = sadd.s32 %s43, 1
    %p47 = scmp.eq.s32.totalorder %s9, 1
    %p48 = scmp.ne.s32.totalorder %s43, %s45
    %p49 = scmp.eq.s32.totalorder %s9, 0
    %p50 = por %p48, %p49
    %p51 = scmp.ne.s32.totalorder %s43, %s45
    %p52 = scmp.eq.s32.totalorder %s14, 1
    %p53 = por %p51, %p52
    %p54 = scmp.ne.s32.totalorder %s45, %s46
    %p55 = scmp.eq.s32.totalorder %s14, 0
    %p56 = por %p54, %p55
    %p57 = scmp.ne.s32.totalorder %s45, %s46
    %p58 = scmp.eq.s32.totalorder %s15, 1
    %p59 = por %p57, %p58
    %p61 = scmp.ne.s32.totalorder %s46, %s60
    %p62 = scmp.eq.s32.totalorder %s15, 0
    %p63 = por %p61, %p62
    %s64 = ssub.s32 %s9, %s16
    %p65 = scmp.eq.s32.totalorder %s64, 0
    %s67 = sadd.s32 %s66, 1
    %s68 = scalar_select %p65, %s66, %s67
    %p71 = pneg %p65
    %p72 = scmp.eq.s32.totalorder %s9, 1
    %p73 = por %p71, %p72
    %p74 = scmp.ne.s32.totalorder %s66, %s69
    %p75 = scmp.eq.s32.totalorder %s9, 0
    %p76 = por %p74, %p75
    %p77 = scmp.ne.s32.totalorder %s66, %s69
    %p78 = scmp.eq.s32.totalorder %s14, 1
    %p79 = por %p77, %p78
    %p80 = scmp.ne.s32.totalorder %s69, %s70
    %p81 = scmp.eq.s32.totalorder %s14, 0
    %p82 = por %p80, %p81
    %p83 = scmp.ne.s32.totalorder %s69, %s70
    %p84 = scmp.eq.s32.totalorder %s15, 1
    %p85 = por %p83, %p84
    %p87 = scmp.ne.s32.totalorder %s70, %s86
    %p88 = scmp.eq.s32.totalorder %s15, 0
    %p89 = por %p87, %p88
    %s90 = ssub.s32 %s9, %s16
    %p91 = scmp.eq.s32.totalorder %s90, 0
    %s93 = sadd.s32 %s92, 1
    %s94 = scalar_select %p91, %s92, %s93
    %p97 = pneg %p91
    %p98 = scmp.eq.s32.totalorder %s9, 1
    %p99 = por %p97, %p98
    %p100 = scmp.ne.s32.totalorder %s92, %s95
    %p101 = scmp.eq.s32.totalorder %s9, 0
    %p102 = por %p100, %p101
    %p103 = scmp.ne.s32.totalorder %s92, %s95
    %p104 = scmp.eq.s32.totalorder %s14, 1
    %p105 = por %p103, %p104
    %p106 = scmp.ne.s32.totalorder %s95, %s96
    %p107 = scmp.eq.s32.totalorder %s14, 0
    %p108 = por %p106, %p107
    %p109 = scmp.ne.s32.totalorder %s95, %s96
    %p110 = scmp.eq.s32.totalorder %s15, 1
    %p111 = por %p109, %p110
    %p113 = scmp.ne.s32.totalorder %s96, %s112
    %p114 = scmp.eq.s32.totalorder %s15, 0
    %p115 = por %p113, %p114
    %p116 = scmp.le.s32.totalorder 1, %s9
    %p117 = scmp.lt.s32.totalorder %s9, 3
    %p118 = pnand %p116, %p117
    %p119 = pneg %p118
    // Predicated region
    $region9: #{tpu_custom_call.1} parent=5 // pred_check
      _
    $region10: #{tpu_custom_call.1} parent=5 // pred_check_branch
      %121 = sbr.rel (%p118) target = $region12
    $region11: #{tpu_custom_call.1} parent=5 // pred_region
      %s122 = ssub.s32 %s9, 1
      // Predicated region
      $region13: #{tpu_custom_call.1} parent=11 // pred_check
        %p123 = pneg %p56
      $region14: #{tpu_custom_call.1} parent=11 // pred_check_branch
        %125 = sbr.rel (%p123) target = $region16
      $region15: #{tpu_custom_call.1} parent=11 // pred_region
        _
      $region16: #{tpu_custom_call.1} parent=11 // pred_fallthru
        _
    $region12: #{tpu_custom_call.1} parent=5 // pred_fallthru
      _
    %p126 = scmp.lt.s32.totalorder %s9, 2
    // Predicated region
    $region17: #{tpu_custom_call.1} parent=5 // pred_check
      %p127 = pneg %p126
    $region18: #{tpu_custom_call.1} parent=5 // pred_check_branch
      %129 = sbr.rel (%p127) target = $region20
    $region19: #{tpu_custom_call.1} parent=5 // pred_region
      // Predicated region
      $region21: #{tpu_custom_call.1} parent=19 // pred_check
        %p130 = pneg %p29
      $region22: #{tpu_custom_call.1} parent=19 // pred_check_branch
        %132 = sbr.rel (%p130) target = $region24
      $region23: #{tpu_custom_call.1} parent=19 // pred_region
        %s133 = smul.u32 3, %s9
        %p134 = scmp.lt.s32.totalorder %s133, 5
        %s135 = scalar_select %p134, %s133, 5
        %s136 = smul.addr %s135, 4
        %s137 = smul.addr %s136, 8
        %s138 = scalar_lea.vmem %s0, %s137
        %s139 = smul.u32 3, %s9
      $region24: #{tpu_custom_call.1} parent=19 // pred_fallthru
        _
      // Predicated region
      $region25: #{tpu_custom_call.1} parent=19 // pred_check
        %p140 = pneg %p76
      $region26: #{tpu_custom_call.1} parent=19 // pred_check_branch
        %142 = sbr.rel (%p140) target = $region28
      $region27: #{tpu_custom_call.1} parent=19 // pred_region
        %s143 = smul.u32 3, %s9
        %p144 = scmp.lt.s32.totalorder %s143, 5
        %s145 = scalar_select %p144, %s143, 5
        %s146 = smul.addr %s145, 2
        %s147 = scalar_lea.vmem %s2, %s146
        %s148 = smul.u32 3, %s9
      $region28: #{tpu_custom_call.1} parent=19 // pred_fallthru
        _
    $region20: #{tpu_custom_call.1} parent=5 // pred_fallthru
      _
    %p149 = scmp.le.s32.totalorder 1, %s9
    %p150 = scmp.lt.s32.totalorder %s9, 3
    %p151 = pnand %p149, %p150
    %p152 = pneg %p151
    // Predicated region
    $region29: #{tpu_custom_call.1} parent=5 // pred_check
      _
    $region30: #{tpu_custom_call.1} parent=5 // pred_check_branch
      %154 = sbr.rel (%p151) target = $region32
    $region31: #{tpu_custom_call.1} parent=5 // pred_region
      %s155 = ssub.s32 %s9, 1
      %s156 = smul.u32 3, %s14
      %p157 = scmp.lt.s32.totalorder %s156, 5
      %s158 = scalar_select %p157, %s156, 5
      %s159 = smul.addr %s158, 4
      %s160 = smul.addr %s159, 8
      %s161 = scalar_lea.vmem %s0, %s160
      %p162 = pneg %p35
      %p163 = pneg %p32
      %p164 = pneg %p56
      %p165 = pneg %p53
      %s166 = smul.u32 3, %s14
      %p167 = scmp.lt.s32.totalorder %s166, 5
      %s168 = scalar_select %p167, %s166, 5
      %s169 = smul.addr %s168, 2
      %s170 = scalar_lea.vmem %s2, %s169
      %p171 = pneg %p82
      %p172 = pneg %p79
      %p173 = pneg %p108
      %p174 = pneg %p105
      %s175 = smul.u32 3, %s14
      %p176 = scmp.lt.s32.totalorder %s175, 5
      %s177 = scalar_select %p176, %s175, 5
      %s178 = smul.addr %s177, 4
      %s179 = smul.addr %s178, 8
      %s180 = scalar_lea.vmem %s3, %s179
      %s181 = smul.u32 3, %s14
      %p182 = scmp.lt.s32.totalorder %s181, 5
      %s183 = scalar_select %p182, %s181, 5
      %s184 = smul.addr %s183, 4
      %s185 = smul.addr %s184, 8
      %s186 = scalar_lea.vmem %s0, %s185
      %s187 = smul.u32 3, %s14
      %s188 = smul.u32 3, %s14
      %p189 = scmp.lt.s32.totalorder %s188, 5
      %s190 = scalar_select %p189, %s188, 5
      %s191 = smul.addr %s190, 2
      %s192 = scalar_lea.vmem %s2, %s191
      %s193 = smul.u32 3, %s14
      %s194 = smul.u32 3, %s14
      %p195 = scmp.lt.s32.totalorder %s194, 5
      %s196 = scalar_select %p195, %s194, 5
      %s197 = smul.addr %s196, 4
      %s198 = smul.addr %s197, 8
      %s199 = scalar_lea.vmem %s3, %s198
      %s200 = smul.u32 3, %s14
      %v201 = vld [vmem:[%s186] sm:$0xff]
      %v202 = vld [vmem:[%s186 + $0x8] sm:$0xff]
      %v203 = vld [vmem:[%s186 + $0x10] sm:$0x1]
      %v204 = vld [vmem:[%s186 + $0x18] sm:$0x1]
      %v205 = vld [vmem:[%s186 + $0x20] sm:$0xff]
      %v206 = vld [vmem:[%s186 + $0x28] sm:$0xff]
      %v207 = vld [vmem:[%s186 + $0x30] sm:$0x1]
      %v208 = vld [vmem:[%s186 + $0x38] sm:$0x1]
      %v209 = vld [vmem:[%s186 + $0x40] sm:$0xff]
      %v210 = vld [vmem:[%s186 + $0x48] sm:$0xff]
      %v211 = vld [vmem:[%s186 + $0x50] sm:$0x1]
      %v212 = vld [vmem:[%s186 + $0x58] sm:$0x1]
      %v213 = vld [vmem:[%s1] sm:$0xff]
      %v214 = vld [vmem:[%s192] sm:$0x3]
      %v215 = vld [vmem:[%s192 + $0x2] sm:$0x3]
      %v216 = vld [vmem:[%s192 + $0x4] sm:$0x3]
      %v217 = vxor.u32 %v201, 2147483648
      %v218 = vxor.u32 %v202, 2147483648
      %v219 = vxor.u32 %v205, 2147483648
      %v220 = vxor.u32 %v206, 2147483648
      %v221 = vxor.u32 %v209, 2147483648
      %v222 = vxor.u32 %v210, 2147483648
      %v223 = vmul.f32 %v217, 1.442695
      %v224 = vpow.pop %v223
      %v225 = vmul.f32 %v218, 1.442695
      %v226 = vpow.pop %v225
      %v227 = vmul.f32 %v219, 1.442695
      %v228 = vpow.pop %v227
      %v229 = vmul.f32 %v220, 1.442695
      %v230 = vpow.pop %v229
      %v231 = vmul.f32 %v221, 1.442695
      %v232 = vpow.pop %v231
      %v233 = vmul.f32 %v222, 1.442695
      %v234 = vpow.pop %v233
      %v235 = vadd.f32 %v224, 1.0
      %v236 = vadd.f32 %v226, 1.0
      %v237 = vadd.f32 %v228, 1.0
      %v238 = vadd.f32 %v230, 1.0
      %v239 = vadd.f32 %v232, 1.0
      %v240 = vadd.f32 %v234, 1.0
      %v241 = vrcp.pop %v235
      %v242 = vmul.f32 %v235, %v241
      %v243 = vsub.f32 1.0, %v242
      %v244 = vmul.f32 %v241, %v243
      %v245 = vadd.f32 %v241, %v244
      %vm246 = vweird.f32 %v235
      %vm247 = vweird.f32 %v241
      %vm248 = vmor %vm246, %vm247
      %v249 = vsel %vm248, %v241, %v245
      %v250 = vand.u32 2147483647, %v235
      %vm251 = vcmp.eq.f32.partialorder %v250, 8.507059e+37
      %v252 = vand.u32 %v235, 2147483648
      %v253 = vor.u32 1.1754944e-38, %v252
      %v254 = vsel %vm251, %v253, %v249
      %v255 = vmul.f32 1.0, %v254
      %v256 = vrcp.pop %v236
      %v257 = vmul.f32 %v236, %v256
      %v258 = vsub.f32 1.0, %v257
      %v259 = vmul.f32 %v256, %v258
      %v260 = vadd.f32 %v256, %v259
      %vm261 = vweird.f32 %v236
      %vm262 = vweird.f32 %v256
      %vm263 = vmor %vm261, %vm262
      %v264 = vsel %vm263, %v256, %v260
      %v265 = vand.u32 2147483647, %v236
      %vm266 = vcmp.eq.f32.partialorder %v265, 8.507059e+37
      %v267 = vand.u32 %v236, 2147483648
      %v268 = vor.u32 1.1754944e-38, %v267
      %v269 = vsel %vm266, %v268, %v264
      %v270 = vmul.f32 1.0, %v269
      %v271 = vrcp.pop %v237
      %v272 = vmul.f32 %v237, %v271
      %v273 = vsub.f32 1.0, %v272
      %v274 = vmul.f32 %v271, %v273
      %v275 = vadd.f32 %v271, %v274
      %vm276 = vweird.f32 %v237
      %vm277 = vweird.f32 %v271
      %vm278 = vmor %vm276, %vm277
      %v279 = vsel %vm278, %v271, %v275
      %v280 = vand.u32 2147483647, %v237
      %vm281 = vcmp.eq.f32.partialorder %v280, 8.507059e+37
      %v282 = vand.u32 %v237, 2147483648
      %v283 = vor.u32 1.1754944e-38, %v282
      %v284 = vsel %vm281, %v283, %v279
      %v285 = vmul.f32 1.0, %v284
      %v286 = vrcp.pop %v238
      %v287 = vmul.f32 %v238, %v286
      %v288 = vsub.f32 1.0, %v287
      %v289 = vmul.f32 %v286, %v288
      %v290 = vadd.f32 %v286, %v289
      %vm291 = vweird.f32 %v238
      %vm292 = vweird.f32 %v286
      %vm293 = vmor %vm291, %vm292
      %v294 = vsel %vm293, %v286, %v290
      %v295 = vand.u32 2147483647, %v238
      %vm296 = vcmp.eq.f32.partialorder %v295, 8.507059e+37
      %v297 = vand.u32 %v238, 2147483648
      %v298 = vor.u32 1.1754944e-38, %v297
      %v299 = vsel %vm296, %v298, %v294
      %v300 = vmul.f32 1.0, %v299
      %v301 = vrcp.pop %v239
      %v302 = vmul.f32 %v239, %v301
      %v303 = vsub.f32 1.0, %v302
      %v304 = vmul.f32 %v301, %v303
      %v305 = vadd.f32 %v301, %v304
      %vm306 = vweird.f32 %v239
      %vm307 = vweird.f32 %v301
      %vm308 = vmor %vm306, %vm307
      %v309 = vsel %vm308, %v301, %v305
      %v310 = vand.u32 2147483647, %v239
      %vm311 = vcmp.eq.f32.partialorder %v310, 8.507059e+37
      %v312 = vand.u32 %v239, 2147483648
      %v313 = vor.u32 1.1754944e-38, %v312
      %v314 = vsel %vm311, %v313, %v309
      %v315 = vmul.f32 1.0, %v314
      %v316 = vrcp.pop %v240
      %v317 = vmul.f32 %v240, %v316
      %v318 = vsub.f32 1.0, %v317
      %v319 = vmul.f32 %v316, %v318
      %v320 = vadd.f32 %v316, %v319
      %vm321 = vweird.f32 %v240
      %vm322 = vweird.f32 %v316
      %vm323 = vmor %vm321, %vm322
      %v324 = vsel %vm323, %v316, %v320
      %v325 = vand.u32 2147483647, %v240
      %vm326 = vcmp.eq.f32.partialorder %v325, 8.507059e+37
      %v327 = vand.u32 %v240, 2147483648
      %v328 = vor.u32 1.1754944e-38, %v327
      %v329 = vsel %vm326, %v328, %v324
      %v330 = vmul.f32 1.0, %v329
      %v331 = vmul.f32 %v201, 1.442695
      %v332 = vpow.pop %v331
      %v333 = vmul.f32 %v202, 1.442695
      %v334 = vpow.pop %v333
      %v335 = vmul.f32 %v205, 1.442695
      %v336 = vpow.pop %v335
      %v337 = vmul.f32 %v206, 1.442695
      %v338 = vpow.pop %v337
      %v339 = vmul.f32 %v209, 1.442695
      %v340 = vpow.pop %v339
      %v341 = vmul.f32 %v210, 1.442695
      %v342 = vpow.pop %v341
      %v343 = vxor.u32 %v203, 2147483648
      %v344 = vxor.u32 %v204, 2147483648
      %v345 = vxor.u32 %v207, 2147483648
      %v346 = vxor.u32 %v208, 2147483648
      %v347 = vxor.u32 %v211, 2147483648
      %v348 = vxor.u32 %v212, 2147483648
      %v349 = vmul.f32 %v343, 1.442695
      %v350 = vpow.pop %v349
      %v351 = vmul.f32 %v344, 1.442695
      %v352 = vpow.pop %v351
      %v353 = vmul.f32 %v345, 1.442695
      %v354 = vpow.pop %v353
      %v355 = vmul.f32 %v346, 1.442695
      %v356 = vpow.pop %v355
      %v357 = vmul.f32 %v347, 1.442695
      %v358 = vpow.pop %v357
      %v359 = vmul.f32 %v348, 1.442695
      %v360 = vpow.pop %v359
      %v361 = vadd.f32 %v350, 1.0
      %v362 = vadd.f32 %v352, 1.0
      %v363 = vadd.f32 %v354, 1.0
      %v364 = vadd.f32 %v356, 1.0
      %v365 = vadd.f32 %v358, 1.0
      %v366 = vadd.f32 %v360, 1.0
      %v367 = vrcp.pop %v361
      %v368 = vmul.f32 %v361, %v367
      %v369 = vsub.f32 1.0, %v368
      %v370 = vmul.f32 %v367, %v369
      %v371 = vadd.f32 %v367, %v370
      %vm372 = vweird.f32 %v361
      %vm373 = vweird.f32 %v367
      %vm374 = vmor %vm372, %vm373
      %v375 = vsel %vm374, %v367, %v371
      %v376 = vand.u32 2147483647, %v361
      %vm377 = vcmp.eq.f32.partialorder %v376, 8.507059e+37
      %v378 = vand.u32 %v361, 2147483648
      %v379 = vor.u32 1.1754944e-38, %v378
      %v380 = vsel %vm377, %v379, %v375
      %v381 = vmul.f32 1.0, %v380
      %v382 = vrcp.pop %v362
      %v383 = vmul.f32 %v362, %v382
      %v384 = vsub.f32 1.0, %v383
      %v385 = vmul.f32 %v382, %v384
      %v386 = vadd.f32 %v382, %v385
      %vm387 = vweird.f32 %v362
      %vm388 = vweird.f32 %v382
      %vm389 = vmor %vm387, %vm388
      %v390 = vsel %vm389, %v382, %v386
      %v391 = vand.u32 2147483647, %v362
      %vm392 = vcmp.eq.f32.partialorder %v391, 8.507059e+37
      %v393 = vand.u32 %v362, 2147483648
      %v394 = vor.u32 1.1754944e-38, %v393
      %v395 = vsel %vm392, %v394, %v390
      %v396 = vmul.f32 1.0, %v395
      %v397 = vrcp.pop %v363
      %v398 = vmul.f32 %v363, %v397
      %v399 = vsub.f32 1.0, %v398
      %v400 = vmul.f32 %v397, %v399
      %v401 = vadd.f32 %v397, %v400
      %vm402 = vweird.f32 %v363
      %vm403 = vweird.f32 %v397
      %vm404 = vmor %vm402, %vm403
      %v405 = vsel %vm404, %v397, %v401
      %v406 = vand.u32 2147483647, %v363
      %vm407 = vcmp.eq.f32.partialorder %v406, 8.507059e+37
      %v408 = vand.u32 %v363, 2147483648
      %v409 = vor.u32 1.1754944e-38, %v408
      %v410 = vsel %vm407, %v409, %v405
      %v411 = vmul.f32 1.0, %v410
      %v412 = vrcp.pop %v364
      %v413 = vmul.f32 %v364, %v412
      %v414 = vsub.f32 1.0, %v413
      %v415 = vmul.f32 %v412, %v414
      %v416 = vadd.f32 %v412, %v415
      %vm417 = vweird.f32 %v364
      %vm418 = vweird.f32 %v412
      %vm419 = vmor %vm417, %vm418
      %v420 = vsel %vm419, %v412, %v416
      %v421 = vand.u32 2147483647, %v364
      %vm422 = vcmp.eq.f32.partialorder %v421, 8.507059e+37
      %v423 = vand.u32 %v364, 2147483648
      %v424 = vor.u32 1.1754944e-38, %v423
      %v425 = vsel %vm422, %v424, %v420
      %v426 = vmul.f32 1.0, %v425
      %v427 = vrcp.pop %v365
      %v428 = vmul.f32 %v365, %v427
      %v429 = vsub.f32 1.0, %v428
      %v430 = vmul.f32 %v427, %v429
      %v431 = vadd.f32 %v427, %v430
      %vm432 = vweird.f32 %v365
      %vm433 = vweird.f32 %v427
      %vm434 = vmor %vm432, %vm433
      %v435 = vsel %vm434, %v427, %v431
      %v436 = vand.u32 2147483647, %v365
      %vm437 = vcmp.eq.f32.partialorder %v436, 8.507059e+37
      %v438 = vand.u32 %v365, 2147483648
      %v439 = vor.u32 1.1754944e-38, %v438
      %v440 = vsel %vm437, %v439, %v435
      %v441 = vmul.f32 1.0, %v440
      %v442 = vrcp.pop %v366
      %v443 = vmul.f32 %v366, %v442
      %v444 = vsub.f32 1.0, %v443
      %v445 = vmul.f32 %v442, %v444
      %v446 = vadd.f32 %v442, %v445
      %vm447 = vweird.f32 %v366
      %vm448 = vweird.f32 %v442
      %vm449 = vmor %vm447, %vm448
      %v450 = vsel %vm449, %v442, %v446
      %v451 = vand.u32 2147483647, %v366
      %vm452 = vcmp.eq.f32.partialorder %v451, 8.507059e+37
      %v453 = vand.u32 %v366, 2147483648
      %v454 = vor.u32 1.1754944e-38, %v453
      %v455 = vsel %vm452, %v454, %v450
      %v456 = vmul.f32 1.0, %v455
      %458 = vst [vmem:[#allocation1] ss:$2 sm:$0xff] %v213
      %v459 = vld.sshfl [vmem:[#allocation1] sm:$0xff pattern:$0x75316420]
      %v460 = vld.sshfl [vmem:[#allocation1 + $0x8] sm:$0xff pattern:$0x75316420]
      %s461 = scalar_lea.vmem [#allocation1], 16
      %462 = vst [vmem:[%s461] ss:$2 sm:$0xff] %v213
      %v463 = vld.sshfl [vmem:[#allocation1 + $0x10] sm:$0xff pattern:$0x75316420]
      %v464 = vld.sshfl [vmem:[#allocation1 + $0x18] sm:$0xff pattern:$0x75316420]
      %s465 = scalar_lea.vmem [#allocation1], 32
      %466 = vst [vmem:[%s465] ss:$2 sm:$0xff] %v213
      %v467 = vld.sshfl [vmem:[#allocation1 + $0x20] sm:$0xff pattern:$0x75316420]
      %v468 = vld.sshfl [vmem:[#allocation1 + $0x28] sm:$0xff pattern:$0x75316420]
      %v469 = vrot.slane %v459, 2
      %v470 = vrot.slane %v460, 2
      %v471 = vrot.slane %v463, 2
      %v472 = vrot.slane %v464, 2
      %v473 = vrot.slane %v467, 2
      %v474 = vrot.slane %v468, 2
      %v481 = vmul.f32 %v255, %v469
      %v482 = vmul.f32 %v270, %v470
      %v483 = vmul.f32 %v285, %v471
      %v484 = vmul.f32 %v300, %v472
      %v485 = vmul.f32 %v315, %v473
      %v486 = vmul.f32 %v330, %v474
      %487 = vst [vmem:[#allocation1] ss:$2 sm:$0xff] %v213
      %v488 = vld.sshfl [vmem:[#allocation1] sm:$0xff pattern:$0x75316420]
      %v489 = vld.sshfl [vmem:[#allocation1 + $0x8] sm:$0xff pattern:$0x75316420]
      %s490 = scalar_lea.vmem [#allocation1], 16
      %491 = vst [vmem:[%s490] ss:$2 sm:$0xff] %v213
      %v492 = vld.sshfl [vmem:[#allocation1 + $0x10] sm:$0xff pattern:$0x75316420]
      %v493 = vld.sshfl [vmem:[#allocation1 + $0x18] sm:$0xff pattern:$0x75316420]
      %s494 = scalar_lea.vmem [#allocation1], 32
      %495 = vst [vmem:[%s494] ss:$2 sm:$0xff] %v213
      %v496 = vld.sshfl [vmem:[#allocation1 + $0x20] sm:$0xff pattern:$0x75316420]
      %v497 = vld.sshfl [vmem:[#allocation1 + $0x28] sm:$0xff pattern:$0x75316420]
      %v504 = vadd.f32 %v481, %v488
      %v505 = vadd.f32 %v482, %v489
      %v506 = vadd.f32 %v483, %v492
      %v507 = vadd.f32 %v484, %v493
      %v508 = vadd.f32 %v485, %v496
      %v509 = vadd.f32 %v486, %v497
      %510 = vst [vmem:[%s199] sm:$0x3] %v504
      %511 = vst [vmem:[%s199 + $0x8] sm:$0x3] %v505
      %512 = vst [vmem:[%s199 + $0x20] sm:$0x3] %v506
      %513 = vst [vmem:[%s199 + $0x28] sm:$0x3] %v507
      %514 = vst [vmem:[%s199 + $0x40] sm:$0x3] %v508
      %515 = vst [vmem:[%s199 + $0x48] sm:$0x3] %v509
      %517 = vset.pattern.permute.xlu0 0
      %518 = vperm.xlu0 %517, %v214
      %v519 = vpop.permute.xlu0 %518
      %521 = vset.pattern.permute.xlu0 0
      %522 = vperm.xlu0 %521, %v215
      %v523 = vpop.permute.xlu0 %522
      %525 = vset.pattern.permute.xlu0 0
      %526 = vperm.xlu0 %525, %v216
      %v527 = vpop.permute.xlu0 %526
      %v528 = vrot.slane %v519, 6
      %v529 = vrot.slane %v523, 6
      %v530 = vrot.slane %v527, 6
      %v534 = vmul.f32 %v332, %v528
      %v535 = vmul.f32 %v334, %v528
      %v536 = vmul.f32 %v336, %v529
      %v537 = vmul.f32 %v338, %v529
      %v538 = vmul.f32 %v340, %v530
      %v539 = vmul.f32 %v342, %v530
      %540 = vst [vmem:[%s199] sm:$0xc] %v534
      %541 = vst [vmem:[%s199 + $0x8] sm:$0xc] %v535
      %542 = vst [vmem:[%s199 + $0x20] sm:$0xc] %v536
      %543 = vst [vmem:[%s199 + $0x28] sm:$0xc] %v537
      %544 = vst [vmem:[%s199 + $0x40] sm:$0xc] %v538
      %545 = vst [vmem:[%s199 + $0x48] sm:$0xc] %v539
      %546 = vst [vmem:[%s199] sm:$0xf0] %v255
      %547 = vst [vmem:[%s199 + $0x8] sm:$0xf0] %v270
      %548 = vst [vmem:[%s199 + $0x10] sm:$0x1] %v381
      %549 = vst [vmem:[%s199 + $0x18] sm:$0x1] %v396
      %550 = vst [vmem:[%s199 + $0x20] sm:$0xf0] %v285
      %551 = vst [vmem:[%s199 + $0x28] sm:$0xf0] %v300
      %552 = vst [vmem:[%s199 + $0x30] sm:$0x1] %v411
      %553 = vst [vmem:[%s199 + $0x38] sm:$0x1] %v426
      %554 = vst [vmem:[%s199 + $0x40] sm:$0xf0] %v315
      %555 = vst [vmem:[%s199 + $0x48] sm:$0xf0] %v330
      %556 = vst [vmem:[%s199 + $0x50] sm:$0x1] %v441
      %557 = vst [vmem:[%s199 + $0x58] sm:$0x1] %v456
      %s558 = smul.u32 3, %s14
      %p559 = scmp.lt.s32.totalorder %s558, 5
      %s560 = scalar_select %p559, %s558, 5
      %s561 = smul.addr %s560, 4
      %s562 = smul.addr %s561, 8
      %s563 = scalar_lea.vmem %s3, %s562
      // Predicated region
      $region33: #{tpu_custom_call.1} parent=31 // pred_check
        %p564 = pneg %p105
      $region34: #{tpu_custom_call.1} parent=31 // pred_check_branch
        %566 = sbr.rel (%p564) target = $region36
      $region35: #{tpu_custom_call.1} parent=31 // pred_region
        %s567 = smul.u32 3, %s14
      $region36: #{tpu_custom_call.1} parent=31 // pred_fallthru
        _
    $region32: #{tpu_custom_call.1} parent=5 // pred_fallthru
      _
    %p568 = scmp.le.s32.totalorder 2, %s9
    // Predicated region
    $region37: #{tpu_custom_call.1} parent=5 // pred_check
      %p569 = pneg %p568
    $region38: #{tpu_custom_call.1} parent=5 // pred_check_branch
      %571 = sbr.rel (%p569) target = $region40
    $region39: #{tpu_custom_call.1} parent=5 // pred_region
      %s572 = ssub.s32 %s9, 2
      // Predicated region
      $region41: #{tpu_custom_call.1} parent=39 // pred_check
        %p573 = pneg %p111
      $region42: #{tpu_custom_call.1} parent=39 // pred_check_branch
        %575 = sbr.rel (%p573) target = $region44
      $region43: #{tpu_custom_call.1} parent=39 // pred_region
        %s576 = smul.u32 3, %s15
        %p577 = scmp.lt.s32.totalorder %s576, 5
        %s578 = scalar_select %p577, %s576, 5
        %s579 = smul.addr %s578, 4
        %s580 = smul.addr %s579, 8
        %s581 = scalar_lea.vmem %s3, %s580
      $region44: #{tpu_custom_call.1} parent=39 // pred_fallthru
        _
    $region40: #{tpu_custom_call.1} parent=5 // pred_fallthru
      _
  $region6: #{tpu_custom_call.1} parent=0 // loop_footer
    %s13 = sadd.s32 1, %s9
  $region7: #{tpu_custom_call.1} parent=0 // loop_footer_branch
    %8 = sbr.rel target = $region3
  $region8: #{tpu_custom_call.1} parent=0 // loop_exit
    _

</llo_original>
